<compile_context>
chip_gen: v5e
topology: v5e:2x2
jax: 0.10.0
libtpu: 0.0.40
codegen_flags: <defaults>
</compile_context>

<pallas_src>
import functools
import math

import jax
import jax.numpy as jnp
from jax.experimental import pallas as pl
from jax.experimental.pallas import tpu as pltpu


# ------------------------------------------------------------------
# Parameter construction (plain JAX glue, deterministic).
# ------------------------------------------------------------------
def uniform_directions(n: int, dim: int) -> jnp.ndarray:
    primes = [2, 3, 5, 7, 11, 13, 17, 19]
    x = 23
    while len(primes) < dim:
        if all(x % p != 0 for p in primes):
            primes.append(x)
        x += 2
    primes = jnp.asarray(primes[:dim], dtype=jnp.float32)
    idx = jnp.arange(1, n + 1, dtype=jnp.float32).reshape(n, 1)
    z = jnp.mod(idx * jnp.sqrt(primes), 1.0)
    z = math.sqrt(2.0) * jax.scipy.special.erfinv(2.0 * z - 1.0)
    directions = z / jnp.linalg.norm(z, axis=1, keepdims=True)
    return directions.astype(jnp.float32)


def make_freqs_hFP(pos_dim: int, n_heads: int, head_dim: int,
                   min_freq: float, max_freq: float) -> jnp.ndarray:
    n_freqs = head_dim // 2
    directions_hFP = uniform_directions(n_heads * n_freqs, pos_dim).reshape(
        n_heads, n_freqs, pos_dim)
    omega_F1 = min_freq * (max_freq / min_freq) ** jnp.linspace(
        0.0, 1.0, n_freqs, dtype=jnp.float32)
    return directions_hFP * omega_F1[:, None]  # (h, F, P)


# ------------------------------------------------------------------
# Pallas kernel.
# ------------------------------------------------------------------
def rope_kernel(freqs_ref, pos_ref, x_ref, o_ref, *, head_dim: int):
    # freqs_ref: (P, C) f32 -- sign-folded, half-duplicated per-lane freq rows
    # pos_ref:   (rt, P) f32
    # x_ref:     (rt, C)     -- rt rows, C = n_heads * head_dim lanes
    # o_ref:     (rt, C)
    rt, C = x_ref.shape
    P = pos_ref.shape[-1]
    F = head_dim // 2

    # TODO(synk): on v6e/v7x with bf16 inputs, the rotation multiplies could
    # stay in bf16 (keep theta/cos/sin in f32) to halve vreg pressure.
    x = x_ref[...].astype(jnp.float32)

    # theta_s[row, col] = sum_p pos[row, p] * freqs_signed[p, col].
    # P is tiny (2-4): unrolled broadcast FMAs on the VPU, no MXU.
    theta = pos_ref[:, 0:1] * freqs_ref[0:1, :]
    for p in range(1, P):
        theta = theta + pos_ref[:, p:p + 1] * freqs_ref[p:p + 1, :]

    cos_t = jnp.cos(theta)   # == cos(theta)        (cos is even)
    sin_t = jnp.sin(theta)   # == sign * sin(theta) (sign folded into freqs)

    # Swap the two halves within each head's d-wide lane block:
    #   x_swap[col] = x[col + F] on the first half (j <  F)
    #               = x[col - F] on the second half (j >= F)
    col = jax.lax.broadcasted_iota(jnp.int32, (rt, C), 1)
    first_half = (col % head_dim) < F
    x_swap = jnp.where(first_half,
                       pltpu.roll(x, C - F, axis=1),   # reads x[col + F]
                       pltpu.roll(x, F, axis=1))       # reads x[col - F]

    o_ref[...] = (x * cos_t + x_swap * sin_t).astype(o_ref.dtype)


def uniform_ropend_forward(input_NThd: jnp.ndarray,
                           pos_NTP: jnp.ndarray,
                           freqs_hFP: jnp.ndarray,
                           *, target_block_bytes: int = 1 << 20) -> jnp.ndarray:
    N, T, h, d = input_NThd.shape
    P = pos_NTP.shape[-1]
    assert d % 2 == 0
    F = d // 2
    C = h * d
    rows = N * T
    assert freqs_hFP.shape == (h, F, P)

    # Sign-folded, half-duplicated frequency table laid out per output lane:
    #   freqs_signed[p, head*d + j] = (-1 if j < F else +1) * freqs_hFP[head, j % F, p]
    f_PhF = jnp.transpose(freqs_hFP.astype(jnp.float32), (2, 0, 1))        # (P, h, F)
    freqs_signed_PC = jnp.concatenate([-f_PhF, f_PhF], axis=-1).reshape(P, C)

    # Lane-dense flattened views (free reshapes, no data movement).
    x_RC = input_NThd.reshape(rows, C)
    pos_RP = pos_NTP.reshape(rows, P).astype(jnp.float32)

    # Large row tiles: ~target_block_bytes of x per grid step, multiple of 8 rows.
    itemsize = jnp.dtype(input_NThd.dtype).itemsize
    desired = max(8, target_block_bytes // (C * itemsize))
    row_tile = min(desired, rows)
    row_tile = max(8, (row_tile // 8) * 8)
    n_tiles = -(-rows // row_tile)
    padded_rows = n_tiles * row_tile
    if padded_rows != rows:
        x_RC = jnp.pad(x_RC, ((0, padded_rows - rows), (0, 0)))
        pos_RP = jnp.pad(pos_RP, ((0, padded_rows - rows), (0, 0)))

    kernel = functools.partial(rope_kernel, head_dim=d)
    out = pl.pallas_call(
        kernel,
        out_shape=jax.ShapeDtypeStruct((padded_rows, C), input_NThd.dtype),
        grid_spec=pltpu.PrefetchScalarGridSpec(
            num_scalar_prefetch=0,
            grid=(n_tiles,),
            in_specs=[
                pl.BlockSpec((P, C), lambda i: (0, 0)),          # freqs (resident)
                pl.BlockSpec((row_tile, P), lambda i: (i, 0)),   # pos
                pl.BlockSpec((row_tile, C), lambda i: (i, 0)),   # x
            ],
            out_specs=pl.BlockSpec((row_tile, C), lambda i: (i, 0)),
        ),
        compiler_params=pltpu.CompilerParams(
            dimension_semantics=("parallel",)),
    )(freqs_signed_PC, pos_RP, x_RC)

    return out[:rows].reshape(N, T, h, d)


# ------------------------------------------------------------------
# Reference (plain JAX) for a sanity check.
# ------------------------------------------------------------------
def uniform_ropend_ref(input_NThd, pos_NTP, freqs_hFP):
    x = input_NThd.astype(jnp.float32)
    F = x.shape[-1] // 2
    x_half, y_half = x[..., :F], x[..., F:]
    theta = jnp.einsum("ntp,hfp->nthf", pos_NTP.astype(jnp.float32), freqs_hFP)
    c, s = jnp.cos(theta), jnp.sin(theta)
    out = jnp.concatenate([x_half * c - y_half * s,
                           x_half * s + y_half * c], axis=-1)
    return out.astype(input_NThd.dtype)


if __name__ == "__main__":
    key = jax.random.PRNGKey(0)

    # Config 1: N=2, T=16, heads=4, head_dim=32 (C = h*d = 128), pos_dim=2.
    N, T, n_heads, head_dim, pos_dim = 2, 16, 4, 32, 2
    freqs_hFP = make_freqs_hFP(pos_dim, n_heads, head_dim, 0.2, 10.0)
    k1, k2, key = (*jax.random.split(key, 2), key)
    x = jax.random.normal(k1, (N, T, n_heads, head_dim), dtype=jnp.float32)
    pos = jax.random.uniform(k2, (N, T, pos_dim), dtype=jnp.float32) * 16.0
    out = jax.block_until_ready(uniform_ropend_forward(x, pos, freqs_hFP))
    ref = uniform_ropend_ref(x, pos, freqs_hFP)
    assert out.shape == x.shape and out.dtype == x.dtype
    assert jnp.allclose(out, ref, atol=1e-4, rtol=1e-4)

    # Config 2: ragged row count (N*T=5 -> padded to 8), different head config.
    N2, T2, h2, d2, P2 = 1, 5, 2, 64, 3
    freqs2 = make_freqs_hFP(P2, h2, d2, 0.5, 8.0)
    k3, k4 = jax.random.split(jax.random.PRNGKey(0))
    x2 = jax.random.normal(k3, (N2, T2, h2, d2), dtype=jnp.float32)
    pos2 = jax.random.uniform(k4, (N2, T2, P2), dtype=jnp.float32) * 8.0
    out2 = jax.block_until_ready(uniform_ropend_forward(x2, pos2, freqs2))
    ref2 = uniform_ropend_ref(x2, pos2, freqs2)
    assert out2.shape == x2.shape and out2.dtype == x2.dtype
    assert jnp.allclose(out2, ref2, atol=1e-4, rtol=1e-4)

    print("KERNEL_OK")
</pallas_src>

<mosaic_0001>
module attributes {stable_mosaic.version = 11 : i64} {
  func.func @rope_kernel(%arg0: i32, %arg1: memref<2x128xf32, #tpu.memory_space<vmem>>, %arg2: memref<32x2xf32, #tpu.memory_space<vmem>>, %arg3: memref<32x128xf32, #tpu.memory_space<vmem>>, %arg4: memref<32x128xf32, #tpu.memory_space<vmem>>) attributes {dimension_semantics = [#tpu.dimension_semantics<parallel>], iteration_bounds = array<i64: 1>, scalar_prefetch = 0 : i64, scratch_operands = 0 : i64, tpu.core_type = #tpu.core_type<tc>, window_params = [{pipeline_mode = #tpu.pipeline_mode<synchronous>, transform_indices = @transform_0, window_bounds = array<i64: 2, 128>}, {transform_indices = @transform_1, window_bounds = array<i64: 32, 2>}, {transform_indices = @transform_2, window_bounds = array<i64: 32, 128>}, {transform_indices = @transform_3, window_bounds = array<i64: 32, 128>}]} {
    %c0 = arith.constant 0 : index
    %c0_0 = arith.constant 0 : index
    %0 = vector.load %arg3[%c0, %c0_0] : memref<32x128xf32, #tpu.memory_space<vmem>>, vector<32x128xf32>
    %c0_1 = arith.constant 0 : index
    %c0_2 = arith.constant 0 : index
    %1 = vector.load %arg2[%c0_1, %c0_2] : memref<32x2xf32, #tpu.memory_space<vmem>>, vector<32x1xf32>
    %c0_3 = arith.constant 0 : index
    %c0_4 = arith.constant 0 : index
    %2 = vector.load %arg1[%c0_3, %c0_4] : memref<2x128xf32, #tpu.memory_space<vmem>>, vector<1x128xf32>
    %3 = vector.broadcast %1 : vector<32x1xf32> to vector<32x128xf32>
    %4 = vector.broadcast %2 : vector<1x128xf32> to vector<32x128xf32>
    %5 = arith.mulf %3, %4 : vector<32x128xf32>
    %c0_5 = arith.constant 0 : index
    %c1 = arith.constant 1 : index
    %6 = vector.load %arg2[%c0_5, %c1] : memref<32x2xf32, #tpu.memory_space<vmem>>, vector<32x1xf32>
    %c1_6 = arith.constant 1 : index
    %c0_7 = arith.constant 0 : index
    %7 = vector.load %arg1[%c1_6, %c0_7] : memref<2x128xf32, #tpu.memory_space<vmem>>, vector<1x128xf32>
    %8 = vector.broadcast %6 : vector<32x1xf32> to vector<32x128xf32>
    %9 = vector.broadcast %7 : vector<1x128xf32> to vector<32x128xf32>
    %10 = arith.mulf %8, %9 : vector<32x128xf32>
    %11 = arith.addf %5, %10 : vector<32x128xf32>
    %12 = math.cos %11 : vector<32x128xf32>
    %13 = math.sin %11 : vector<32x128xf32>
    %14 = tpu.iota {dimensions = array<i32: 1>} : vector<32x128xi32>
    %c32_i32 = arith.constant 32 : i32
    %c0_i32 = arith.constant 0 : i32
    %15 = arith.cmpi eq, %c32_i32, %c0_i32 : i32
    %c1_i32 = arith.constant 1 : i32
    %16 = arith.select %15, %c1_i32, %c32_i32 : i32
    %17 = vector.broadcast %16 : i32 to vector<32x128xi32>
    %18 = arith.remsi %14, %17 : vector<32x128xi32>
    %c0_i32_8 = arith.constant 0 : i32
    %19 = vector.broadcast %c0_i32_8 : i32 to vector<32x128xi32>
    %20 = arith.cmpi ne, %18, %19 : vector<32x128xi32>
    %c0_i32_9 = arith.constant 0 : i32
    %21 = vector.broadcast %c0_i32_9 : i32 to vector<32x128xi32>
    %22 = arith.cmpi slt, %18, %21 : vector<32x128xi32>
    %c0_i32_10 = arith.constant 0 : i32
    %23 = arith.cmpi slt, %16, %c0_i32_10 : i32
    %24 = vector.broadcast %23 : i1 to vector<32x128xi1>
    %25 = vector.broadcast %24 : vector<32x128xi1> to vector<32x128xi1>
    %26 = arith.xori %22, %25 : vector<32x128xi1>
    %27 = arith.andi %26, %20 : vector<32x128xi1>
    %28 = vector.broadcast %16 : i32 to vector<32x128xi32>
    %29 = arith.addi %18, %28 : vector<32x128xi32>
    %30 = arith.select %27, %29, %18 : vector<32x128xi1>, vector<32x128xi32>
    %c16_i32 = arith.constant 16 : i32
    %31 = vector.broadcast %c16_i32 : i32 to vector<32x128xi32>
    %32 = arith.cmpi slt, %30, %31 : vector<32x128xi32>
    %c112_i32 = arith.constant 112 : i32
    %33 = tpu.dynamic_rotate %0 by %c112_i32 dim 1 : vector<32x128xf32>, i32 -> vector<32x128xf32>
    %c16_i32_11 = arith.constant 16 : i32
    %34 = tpu.dynamic_rotate %0 by %c16_i32_11 dim 1 : vector<32x128xf32>, i32 -> vector<32x128xf32>
    %35 = arith.select %32, %33, %34 : vector<32x128xi1>, vector<32x128xf32>
    %36 = arith.mulf %0, %12 : vector<32x128xf32>
    %37 = arith.mulf %35, %13 : vector<32x128xf32>
    %38 = arith.addf %36, %37 : vector<32x128xf32>
    %c0_12 = arith.constant 0 : index
    %c0_13 = arith.constant 0 : index
    %39 = vector.load %arg4[%c0_12, %c0_13] : memref<32x128xf32, #tpu.memory_space<vmem>>, vector<32x128xf32>
    tpu.vector_store %arg4[%c0_12, %c0_13], %38 {strides = array<i32>} : memref<32x128xf32, #tpu.memory_space<vmem>>, vector<32x128xf32>,
    return
  }
  func.func @transform_0(%arg0: i32) -> (i32, i32) {
    %c0_i32 = arith.constant 0 : i32
    %c0_i32_0 = arith.constant 0 : i32
    %c0_i32_1 = arith.constant 0 : i32
    return %c0_i32, %c0_i32_0 : i32, i32
  }
  func.func @transform_1(%arg0: i32) -> (i32, i32) {
    %c0_i32 = arith.constant 0 : i32
    %c0_i32_0 = arith.constant 0 : i32
    return %arg0, %c0_i32 : i32, i32
  }
  func.func @transform_2(%arg0: i32) -> (i32, i32) {
    %c0_i32 = arith.constant 0 : i32
    %c0_i32_0 = arith.constant 0 : i32
    return %arg0, %c0_i32 : i32, i32
  }
  func.func @transform_3(%arg0: i32) -> (i32, i32) {
    %c0_i32 = arith.constant 0 : i32
    %c0_i32_0 = arith.constant 0 : i32
    return %arg0, %c0_i32 : i32, i32
  }
}

</mosaic_0001>

<llo_original>
// kernel: tpu_custom_call.1
$region0: #{tpu_custom_call.1}
  #allocation0 [shape = 'u32[]', space=smem, size = 0x4, offset = 0x4, fixed_abs, tag = 'smem constant byte address 0x4 - core index']
  #allocation1 [shape = 'u32[72,128]{1,0:T(1,128)}', space=vmem, size = 0x9000, scoped, tag = 'internal scratch']
  %s0 = inlined_call_operand.vmem [shape: f32[2,128], index: 0, kind: input, shape index: {}]
  %s1 = inlined_call_operand.vmem [shape: f32[32,2], index: 1, kind: input, shape index: {}]
  %s2 = inlined_call_operand.vmem [shape: f32[32,128], index: 2, kind: input, shape index: {}]
  %s3 = inlined_call_operand.hbm [shape: f32[32,128], index: 3, kind: output, shape index: {}]
  %s4 = sld [smem:[#allocation0]]
  $region22: #{tpu_custom_call.1} parent=0
    _
  %s6 = ssub.s32 1, %s4
  %s7 = scalar_select 0, %s6, %s4
  $region1: #{tpu_custom_call.1} parent=0
    #allocation2 [shape = 'u8[16384]{0}', space=vmem, size = 0x4000, scoped, tag = 'output window, operand 0, single buffered']
    #allocation3 [shape = 's32[1]{0}', space=sflag, size = 0x4, scoped, tag = 'scoped memory for tpu_custom_call.1']
    %8 = vsyncpa [#allocation3], 0
    // Predicated region
    $region2: #{tpu_custom_call.1} parent=1 // pred_check
      _
    $region3: #{tpu_custom_call.1} parent=1 // pred_check_branch
      %10 = sbr.rel (0) target = $region5
    $region4: #{tpu_custom_call.1} parent=1 // pred_region
      _
    $region5: #{tpu_custom_call.1} parent=1 // pred_fallthru
      _
    // Predicated region
    $region6: #{tpu_custom_call.1} parent=1 // pred_check
      _
    $region7: #{tpu_custom_call.1} parent=1 // pred_check_branch
      %12 = sbr.rel (0) target = $region9
    $region8: #{tpu_custom_call.1} parent=1 // pred_region
      _
    $region9: #{tpu_custom_call.1} parent=1 // pred_fallthru
      _
    // Predicated region
    $region10: #{tpu_custom_call.1} parent=1 // pred_check
      _
    $region11: #{tpu_custom_call.1} parent=1 // pred_check_branch
      %14 = sbr.rel (0) target = $region13
    $region12: #{tpu_custom_call.1} parent=1 // pred_region
      _
    $region13: #{tpu_custom_call.1} parent=1 // pred_fallthru
      _
    %v15 = vld [vmem:[%s2] sm:$0xff]
    %v16 = vld [vmem:[%s2 + $0x8] sm:$0xff]
    %v17 = vld [vmem:[%s2 + $0x10] sm:$0xff]
    %v18 = vld [vmem:[%s2 + $0x18] sm:$0xff]
    %v19 = vld [vmem:[%s1] sm:$0xff]
    %v20 = vld [vmem:[%s1 + $0x8] sm:$0xff]
    %v21 = vld [vmem:[%s1 + $0x10] sm:$0xff]
    %v22 = vld [vmem:[%s1 + $0x18] sm:$0xff]
    %v23 = vld [vmem:[%s0] sm:$0x1]
    %25 = vset.pattern.permute.xlu0 0
    %26 = vperm.xlu0 %25, %v19
    %v27 = vpop.permute.xlu0 %26
    %30 = vset.pattern.permute.xlu0 0
    %31 = vperm.xlu0 %30, %v20
    %v32 = vpop.permute.xlu0 %31
    %35 = vset.pattern.permute.xlu0 0
    %36 = vperm.xlu0 %35, %v21
    %v37 = vpop.permute.xlu0 %36
    %40 = vset.pattern.permute.xlu0 0
    %41 = vperm.xlu0 %40, %v22
    %v42 = vpop.permute.xlu0 %41
    %v44 = vperm.slane %v23, 0
    %v45 = vmul.f32 %v27, %v44
    %v46 = vmul.f32 %v32, %v44
    %v47 = vmul.f32 %v37, %v44
    %v48 = vmul.f32 %v42, %v44
    %v49 = vld [vmem:[%s0 + $0x1] sm:$0x1]
    %50 = vset.pattern.permute.xlu0 1
    %51 = vperm.xlu0 %50, %v19
    %v52 = vpop.permute.xlu0 %51
    %54 = vset.pattern.permute.xlu0 1
    %55 = vperm.xlu0 %54, %v20
    %v56 = vpop.permute.xlu0 %55
    %58 = vset.pattern.permute.xlu0 1
    %59 = vperm.xlu0 %58, %v21
    %v60 = vpop.permute.xlu0 %59
    %62 = vset.pattern.permute.xlu0 1
    %63 = vperm.xlu0 %62, %v22
    %v64 = vpop.permute.xlu0 %63
    %v66 = vperm.slane %v49, 0
    %v67 = vmul.f32 %v52, %v66
    %v68 = vmul.f32 %v56, %v66
    %v69 = vmul.f32 %v60, %v66
    %v70 = vmul.f32 %v64, %v66
    %v71 = vadd.f32 %v45, %v67
    %v72 = vadd.f32 %v46, %v68
    %v73 = vadd.f32 %v47, %v69
    %v74 = vadd.f32 %v48, %v70
    %v75 = vand.u32 2147483647, %v71
    %vm76 = vcmp.le.f32.partialorder %v75, 0.7853982
    %vm77 = vcmp.lt.s32.totalorder %v71, 0
    %v78 = vand.u32 %v71, 2139095040
    %v79 = vshrl.u32 %v78, 23
    %v80 = vsub.s32 %v79, 127
    %v81 = vand.u32 2147483647, %v71
    %v82 = vand.u32 %v81, 8388607
    %v83 = vor.u32 %v82, 8388608
    %v84 = vsub.s32 0, %v83
    %v85 = vadd.s32 %v80, 1
    %vm86 = vcmp.gt.s32.totalorder %v85, 0
    %v87 = vsel %vm86, %v85, 0
    %v88 = vshrl.u32 %v87, 5
    %v89 = vand.u32 %v87, 31
    %v90 = vsub.s32 32, %v89
    %v91 = vshrl.u32 683565275, %v90
    %v92 = vshll.u32 683565275, %v89
    %v93 = vshrl.u32 2475754826, %v90
    %v94 = vor.u32 %v92, %v93
    %v95 = vshll.u32 2475754826, %v89
    %v96 = vshrl.u32 2131351028, %v90
    %v97 = vor.u32 %v95, %v96
    %v98 = vshll.u32 2131351028, %v89
    %v99 = vshrl.u32 2102212464, %v90
    %v100 = vor.u32 %v98, %v99
    %v101 = vshll.u32 2102212464, %v89
    %v102 = vshrl.u32 920167782, %v90
    %v103 = vor.u32 %v101, %v102
    %v104 = vshll.u32 920167782, %v89
    %v105 = vshrl.u32 1326507024, %v90
    %v106 = vor.u32 %v104, %v105
    %vm107 = vcmp.lt.s32.totalorder %v88, 1
    %vm108 = vcmp.lt.s32.totalorder %v88, 2
    %vm109 = vcmp.lt.s32.totalorder %v88, 3
    %vm110 = vcmp.lt.s32.totalorder %v88, 4
    %v111 = vsel %vm107, %v91, %v94
    %v112 = vsel %vm110, %v100, 2102212464
    %v113 = vsel %vm109, %v97, %v112
    %v114 = vsel %vm108, %v111, %v113
    %v115 = vsel %vm107, %v94, %v97
    %v116 = vsel %vm110, %v103, 920167782
    %v117 = vsel %vm109, %v100, %v116
    %v118 = vsel %vm108, %v115, %v117
    %v119 = vsel %vm107, %v97, %v100
    %v120 = vsel %vm110, %v106, 1326507024
    %v121 = vsel %vm109, %v103, %v120
    %v122 = vsel %vm108, %v119, %v121
    %v123 = vshll.u32 %v83, 8
    %v124 = vand.u32 %v123, 65535
    %v125 = vshrl.u32 %v123, 16
    %v126 = vand.u32 %v122, 65535
    %v127 = vshrl.u32 %v122, 16
    %v128 = vmul.u32 %v124, %v126
    %v129 = vmul.u32 %v124, %v127
    %v130 = vmul.u32 %v125, %v126
    %v131 = vmul.u32 %v125, %v127
    %v132 = vshll.u32 %v129, 16
    %v133 = vshrl.u32 %v129, 16
    %v134 = vshll.u32 %v130, 16
    %v135 = vshrl.u32 %v130, 16
    %vm136 = vc.u32 %v128, %v132
    %v137 = vsel %vm136, 1, 0
    %v138 = vadd.s32 %v128, %v132
    %v139 = vadd.s32 %v131, %v137
    %vm140 = vc.u32 %v138, %v134
    %v141 = vsel %vm140, 1, 0
    %v142 = vadd.s32 %v138, %v134
    %v143 = vadd.s32 %v139, %v141
    %v144 = vadd.s32 %v143, %v133
    %v145 = vadd.s32 %v144, %v135
    %v146 = vand.u32 %v123, 65535
    %v147 = vshrl.u32 %v123, 16
    %v148 = vand.u32 %v118, 65535
    %v149 = vshrl.u32 %v118, 16
    %v150 = vmul.u32 %v146, %v148
    %v151 = vmul.u32 %v146, %v149
    %v152 = vmul.u32 %v147, %v148
    %v153 = vmul.u32 %v147, %v149
    %v154 = vshll.u32 %v151, 16
    %v155 = vshrl.u32 %v151, 16
    %v156 = vshll.u32 %v152, 16
    %v157 = vshrl.u32 %v152, 16
    %vm158 = vc.u32 %v150, %v154
    %v159 = vsel %vm158, 1, 0
    %v160 = vadd.s32 %v150, %v154
    %v161 = vadd.s32 %v153, %v159
    %vm162 = vc.u32 %v160, %v156
    %v163 = vsel %vm162, 1, 0
    %v164 = vadd.s32 %v160, %v156
    %v165 = vadd.s32 %v161, %v163
    %v166 = vadd.s32 %v165, %v155
    %v167 = vadd.s32 %v166, %v157
    %v168 = vmul.u32 %v123, %v114
    %v169 = vadd.s32 %v145, %v164
    %vm170 = vc.u32 %v145, %v164
    %v171 = vadd.s32 %v167, 1
    %v172 = vsel %vm170, %v171, %v167
    %v173 = vadd.s32 %v168, %v172
    %v174 = vadd.s32 %v173, 536870912
    %v175 = vshrl.u32 %v174, 30
    %v176 = vshll.u32 %v175, 30
    %v177 = vsub.s32 %v173, %v176
    %vm178 = vcmp.lt.s32.totalorder %v177, 0
    %v179 = vsub.s32 0, %v177
    %v180 = vsel %vm178, %v179, %v177
    %v181 = vclz %v180
    %v182 = vsub.s32 %v181, 2
    %vm183 = vcmp.gt.s32.totalorder 0, %v182
    %v184 = vsel %vm183, 0, %v182
    %v185 = vsub.s32 32, %v184
    %v186 = vshll.u32 %v177, %v184
    %v187 = vshrl.u32 %v169, %v185
    %v188 = vor.u32 %v186, %v187
    %v189 = vsub.s32 4294967266, %v184
    %v190 = vadd.s32 %v189, 127
    %v191 = vshll.u32 %v190, 23
    %v192 = vor.u32 4788187, %v191
    %v193 = vand.u32 2147483647, %v192
    %v195 = vcvt.s32.f32 %v188
    %v196 = vmul.f32 %v195, %v193
    %v197 = vxor.u32 %v196, 2147483648
    %v198 = vsel %vm77, %v197, %v196
    %v199 = vsub.s32 4, %v175
    %v200 = vsel %vm77, %v199, %v175
    %v201 = vsel %vm76, %v71, %v198
    %v202 = vsel %vm76, 0, %v200
    %v203 = vmul.f32 %v201, %v201
    %v204 = vmul.f32 %v203, -0.001358992
    %v205 = vadd.f32 %v204, 0.041655596
    %v206 = vmul.f32 %v203, %v205
    %v207 = vadd.f32 %v206, -0.4999988
    %v208 = vmul.f32 %v203, %v207
    %v209 = vadd.f32 1.0, %v208
    %v210 = vmul.f32 %v201, %v201
    %v211 = vmul.f32 %v210, -0.00019511016
    %v212 = vadd.f32 %v211, 0.008332121
    %v213 = vmul.f32 %v210, %v212
    %v214 = vadd.f32 %v213, -0.16666654
    %v215 = vmul.f32 %v210, %v214
    %v216 = vadd.f32 %v215, 1.0
    %v217 = vmul.f32 %v216, %v201
    %vm218 = vweird.f32 %v71
    %v219 = vand.u32 %v202, 3
    %vm220 = vcmp.lt.s32.totalorder %v219, 2
    %vm221 = vcmp.eq.s32.totalorder %v219, 0
    %v222 = vxor.u32 %v217, 2147483648
    %v223 = vsel %vm221, %v209, %v222
    %vm224 = vcmp.eq.s32.totalorder %v219, 2
    %v225 = vxor.u32 %v209, 2147483648
    %v226 = vsel %vm224, %v225, %v217
    %v227 = vsel %vm220, %v223, %v226
    %v228 = vsel %vm218, nan, %v227
    %v229 = vand.u32 2147483647, %v72
    %vm230 = vcmp.le.f32.partialorder %v229, 0.7853982
    %vm231 = vcmp.lt.s32.totalorder %v72, 0
    %v232 = vand.u32 %v72, 2139095040
    %v233 = vshrl.u32 %v232, 23
    %v234 = vsub.s32 %v233, 127
    %v235 = vand.u32 2147483647, %v72
    %v236 = vand.u32 %v235, 8388607
    %v237 = vor.u32 %v236, 8388608
    %v238 = vsub.s32 0, %v237
    %v239 = vadd.s32 %v234, 1
    %vm240 = vcmp.gt.s32.totalorder %v239, 0
    %v241 = vsel %vm240, %v239, 0
    %v242 = vshrl.u32 %v241, 5
    %v243 = vand.u32 %v241, 31
    %v244 = vsub.s32 32, %v243
    %v245 = vshrl.u32 683565275, %v244
    %v246 = vshll.u32 683565275, %v243
    %v247 = vshrl.u32 2475754826, %v244
    %v248 = vor.u32 %v246, %v247
    %v249 = vshll.u32 2475754826, %v243
    %v250 = vshrl.u32 2131351028, %v244
    %v251 = vor.u32 %v249, %v250
    %v252 = vshll.u32 2131351028, %v243
    %v253 = vshrl.u32 2102212464, %v244
    %v254 = vor.u32 %v252, %v253
    %v255 = vshll.u32 2102212464, %v243
    %v256 = vshrl.u32 920167782, %v244
    %v257 = vor.u32 %v255, %v256
    %v258 = vshll.u32 920167782, %v243
    %v259 = vshrl.u32 1326507024, %v244
    %v260 = vor.u32 %v258, %v259
    %vm261 = vcmp.lt.s32.totalorder %v242, 1
    %vm262 = vcmp.lt.s32.totalorder %v242, 2
    %vm263 = vcmp.lt.s32.totalorder %v242, 3
    %vm264 = vcmp.lt.s32.totalorder %v242, 4
    %v265 = vsel %vm261, %v245, %v248
    %v266 = vsel %vm264, %v254, 2102212464
    %v267 = vsel %vm263, %v251, %v266
    %v268 = vsel %vm262, %v265, %v267
    %v269 = vsel %vm261, %v248, %v251
    %v270 = vsel %vm264, %v257, 920167782
    %v271 = vsel %vm263, %v254, %v270
    %v272 = vsel %vm262, %v269, %v271
    %v273 = vsel %vm261, %v251, %v254
    %v274 = vsel %vm264, %v260, 1326507024
    %v275 = vsel %vm263, %v257, %v274
    %v276 = vsel %vm262, %v273, %v275
    %v277 = vshll.u32 %v237, 8
    %v278 = vand.u32 %v277, 65535
    %v279 = vshrl.u32 %v277, 16
    %v280 = vand.u32 %v276, 65535
    %v281 = vshrl.u32 %v276, 16
    %v282 = vmul.u32 %v278, %v280
    %v283 = vmul.u32 %v278, %v281
    %v284 = vmul.u32 %v279, %v280
    %v285 = vmul.u32 %v279, %v281
    %v286 = vshll.u32 %v283, 16
    %v287 = vshrl.u32 %v283, 16
    %v288 = vshll.u32 %v284, 16
    %v289 = vshrl.u32 %v284, 16
    %vm290 = vc.u32 %v282, %v286
    %v291 = vsel %vm290, 1, 0
    %v292 = vadd.s32 %v282, %v286
    %v293 = vadd.s32 %v285, %v291
    %vm294 = vc.u32 %v292, %v288
    %v295 = vsel %vm294, 1, 0
    %v296 = vadd.s32 %v292, %v288
    %v297 = vadd.s32 %v293, %v295
    %v298 = vadd.s32 %v297, %v287
    %v299 = vadd.s32 %v298, %v289
    %v300 = vand.u32 %v277, 65535
    %v301 = vshrl.u32 %v277, 16
    %v302 = vand.u32 %v272, 65535
    %v303 = vshrl.u32 %v272, 16
    %v304 = vmul.u32 %v300, %v302
    %v305 = vmul.u32 %v300, %v303
    %v306 = vmul.u32 %v301, %v302
    %v307 = vmul.u32 %v301, %v303
    %v308 = vshll.u32 %v305, 16
    %v309 = vshrl.u32 %v305, 16
    %v310 = vshll.u32 %v306, 16
    %v311 = vshrl.u32 %v306, 16
    %vm312 = vc.u32 %v304, %v308
    %v313 = vsel %vm312, 1, 0
    %v314 = vadd.s32 %v304, %v308
    %v315 = vadd.s32 %v307, %v313
    %vm316 = vc.u32 %v314, %v310
    %v317 = vsel %vm316, 1, 0
    %v318 = vadd.s32 %v314, %v310
    %v319 = vadd.s32 %v315, %v317
    %v320 = vadd.s32 %v319, %v309
    %v321 = vadd.s32 %v320, %v311
    %v322 = vmul.u32 %v277, %v268
    %v323 = vadd.s32 %v299, %v318
    %vm324 = vc.u32 %v299, %v318
    %v325 = vadd.s32 %v321, 1
    %v326 = vsel %vm324, %v325, %v321
    %v327 = vadd.s32 %v322, %v326
    %v328 = vadd.s32 %v327, 536870912
    %v329 = vshrl.u32 %v328, 30
    %v330 = vshll.u32 %v329, 30
    %v331 = vsub.s32 %v327, %v330
    %vm332 = vcmp.lt.s32.totalorder %v331, 0
    %v333 = vsub.s32 0, %v331
    %v334 = vsel %vm332, %v333, %v331
    %v335 = vclz %v334
    %v336 = vsub.s32 %v335, 2
    %vm337 = vcmp.gt.s32.totalorder 0, %v336
    %v338 = vsel %vm337, 0, %v336
    %v339 = vsub.s32 32, %v338
    %v340 = vshll.u32 %v331, %v338
    %v341 = vshrl.u32 %v323, %v339
    %v342 = vor.u32 %v340, %v341
    %v343 = vsub.s32 4294967266, %v338
    %v344 = vadd.s32 %v343, 127
    %v345 = vshll.u32 %v344, 23
    %v346 = vor.u32 4788187, %v345
    %v347 = vand.u32 2147483647, %v346
    %v349 = vcvt.s32.f32 %v342
    %v350 = vmul.f32 %v349, %v347
    %v351 = vxor.u32 %v350, 2147483648
    %v352 = vsel %vm231, %v351, %v350
    %v353 = vsub.s32 4, %v329
    %v354 = vsel %vm231, %v353, %v329
    %v355 = vsel %vm230, %v72, %v352
    %v356 = vsel %vm230, 0, %v354
    %v357 = vmul.f32 %v355, %v355
    %v358 = vmul.f32 %v357, -0.001358992
    %v359 = vadd.f32 %v358, 0.041655596
    %v360 = vmul.f32 %v357, %v359
    %v361 = vadd.f32 %v360, -0.4999988
    %v362 = vmul.f32 %v357, %v361
    %v363 = vadd.f32 1.0, %v362
    %v364 = vmul.f32 %v355, %v355
    %v365 = vmul.f32 %v364, -0.00019511016
    %v366 = vadd.f32 %v365, 0.008332121
    %v367 = vmul.f32 %v364, %v366
    %v368 = vadd.f32 %v367, -0.16666654
    %v369 = vmul.f32 %v364, %v368
    %v370 = vadd.f32 %v369, 1.0
    %v371 = vmul.f32 %v370, %v355
    %vm372 = vweird.f32 %v72
    %v373 = vand.u32 %v356, 3
    %vm374 = vcmp.lt.s32.totalorder %v373, 2
    %vm375 = vcmp.eq.s32.totalorder %v373, 0
    %v376 = vxor.u32 %v371, 2147483648
    %v377 = vsel %vm375, %v363, %v376
    %vm378 = vcmp.eq.s32.totalorder %v373, 2
    %v379 = vxor.u32 %v363, 2147483648
    %v380 = vsel %vm378, %v379, %v371
    %v381 = vsel %vm374, %v377, %v380
    %v382 = vsel %vm372, nan, %v381
    %v383 = vand.u32 2147483647, %v73
    %vm384 = vcmp.le.f32.partialorder %v383, 0.7853982
    %vm385 = vcmp.lt.s32.totalorder %v73, 0
    %v386 = vand.u32 %v73, 2139095040
    %v387 = vshrl.u32 %v386, 23
    %v388 = vsub.s32 %v387, 127
    %v389 = vand.u32 2147483647, %v73
    %v390 = vand.u32 %v389, 8388607
    %v391 = vor.u32 %v390, 8388608
    %v392 = vsub.s32 0, %v391
    %v393 = vadd.s32 %v388, 1
    %vm394 = vcmp.gt.s32.totalorder %v393, 0
    %v395 = vsel %vm394, %v393, 0
    %v396 = vshrl.u32 %v395, 5
    %v397 = vand.u32 %v395, 31
    %v398 = vsub.s32 32, %v397
    %v399 = vshrl.u32 683565275, %v398
    %v400 = vshll.u32 683565275, %v397
    %v401 = vshrl.u32 2475754826, %v398
    %v402 = vor.u32 %v400, %v401
    %v403 = vshll.u32 2475754826, %v397
    %v404 = vshrl.u32 2131351028, %v398
    %v405 = vor.u32 %v403, %v404
    %v406 = vshll.u32 2131351028, %v397
    %v407 = vshrl.u32 2102212464, %v398
    %v408 = vor.u32 %v406, %v407
    %v409 = vshll.u32 2102212464, %v397
    %v410 = vshrl.u32 920167782, %v398
    %v411 = vor.u32 %v409, %v410
    %v412 = vshll.u32 920167782, %v397
    %v413 = vshrl.u32 1326507024, %v398
    %v414 = vor.u32 %v412, %v413
    %vm415 = vcmp.lt.s32.totalorder %v396, 1
    %vm416 = vcmp.lt.s32.totalorder %v396, 2
    %vm417 = vcmp.lt.s32.totalorder %v396, 3
    %vm418 = vcmp.lt.s32.totalorder %v396, 4
    %v419 = vsel %vm415, %v399, %v402
    %v420 = vsel %vm418, %v408, 2102212464
    %v421 = vsel %vm417, %v405, %v420
    %v422 = vsel %vm416, %v419, %v421
    %v423 = vsel %vm415, %v402, %v405
    %v424 = vsel %vm418, %v411, 920167782
    %v425 = vsel %vm417, %v408, %v424
    %v426 = vsel %vm416, %v423, %v425
    %v427 = vsel %vm415, %v405, %v408
    %v428 = vsel %vm418, %v414, 1326507024
    %v429 = vsel %vm417, %v411, %v428
    %v430 = vsel %vm416, %v427, %v429
    %v431 = vshll.u32 %v391, 8
    %v432 = vand.u32 %v431, 65535
    %v433 = vshrl.u32 %v431, 16
    %v434 = vand.u32 %v430, 65535
    %v435 = vshrl.u32 %v430, 16
    %v436 = vmul.u32 %v432, %v434
    %v437 = vmul.u32 %v432, %v435
    %v438 = vmul.u32 %v433, %v434
    %v439 = vmul.u32 %v433, %v435
    %v440 = vshll.u32 %v437, 16
    %v441 = vshrl.u32 %v437, 16
    %v442 = vshll.u32 %v438, 16
    %v443 = vshrl.u32 %v438, 16
    %vm444 = vc.u32 %v436, %v440
    %v445 = vsel %vm444, 1, 0
    %v446 = vadd.s32 %v436, %v440
    %v447 = vadd.s32 %v439, %v445
    %vm448 = vc.u32 %v446, %v442
    %v449 = vsel %vm448, 1, 0
    %v450 = vadd.s32 %v446, %v442
    %v451 = vadd.s32 %v447, %v449
    %v452 = vadd.s32 %v451, %v441
    %v453 = vadd.s32 %v452, %v443
    %v454 = vand.u32 %v431, 65535
    %v455 = vshrl.u32 %v431, 16
    %v456 = vand.u32 %v426, 65535
    %v457 = vshrl.u32 %v426, 16
    %v458 = vmul.u32 %v454, %v456
    %v459 = vmul.u32 %v454, %v457
    %v460 = vmul.u32 %v455, %v456
    %v461 = vmul.u32 %v455, %v457
    %v462 = vshll.u32 %v459, 16
    %v463 = vshrl.u32 %v459, 16
    %v464 = vshll.u32 %v460, 16
    %v465 = vshrl.u32 %v460, 16
    %vm466 = vc.u32 %v458, %v462
    %v467 = vsel %vm466, 1, 0
    %v468 = vadd.s32 %v458, %v462
    %v469 = vadd.s32 %v461, %v467
    %vm470 = vc.u32 %v468, %v464
    %v471 = vsel %vm470, 1, 0
    %v472 = vadd.s32 %v468, %v464
    %v473 = vadd.s32 %v469, %v471
    %v474 = vadd.s32 %v473, %v463
    %v475 = vadd.s32 %v474, %v465
    %v476 = vmul.u32 %v431, %v422
    %v477 = vadd.s32 %v453, %v472
    %vm478 = vc.u32 %v453, %v472
    %v479 = vadd.s32 %v475, 1
    %v480 = vsel %vm478, %v479, %v475
    %v481 = vadd.s32 %v476, %v480
    %v482 = vadd.s32 %v481, 536870912
    %v483 = vshrl.u32 %v482, 30
    %v484 = vshll.u32 %v483, 30
    %v485 = vsub.s32 %v481, %v484
    %vm486 = vcmp.lt.s32.totalorder %v485, 0
    %v487 = vsub.s32 0, %v485
    %v488 = vsel %vm486, %v487, %v485
    %v489 = vclz %v488
    %v490 = vsub.s32 %v489, 2
    %vm491 = vcmp.gt.s32.totalorder 0, %v490
    %v492 = vsel %vm491, 0, %v490
    %v493 = vsub.s32 32, %v492
    %v494 = vshll.u32 %v485, %v492
    %v495 = vshrl.u32 %v477, %v493
    %v496 = vor.u32 %v494, %v495
    %v497 = vsub.s32 4294967266, %v492
    %v498 = vadd.s32 %v497, 127
    %v499 = vshll.u32 %v498, 23
    %v500 = vor.u32 4788187, %v499
    %v501 = vand.u32 2147483647, %v500
    %v503 = vcvt.s32.f32 %v496
    %v504 = vmul.f32 %v503, %v501
    %v505 = vxor.u32 %v504, 2147483648
    %v506 = vsel %vm385, %v505, %v504
    %v507 = vsub.s32 4, %v483
    %v508 = vsel %vm385, %v507, %v483
    %v509 = vsel %vm384, %v73, %v506
    %v510 = vsel %vm384, 0, %v508
    %v511 = vmul.f32 %v509, %v509
    %v512 = vmul.f32 %v511, -0.001358992
    %v513 = vadd.f32 %v512, 0.041655596
    %v514 = vmul.f32 %v511, %v513
    %v515 = vadd.f32 %v514, -0.4999988
    %v516 = vmul.f32 %v511, %v515
    %v517 = vadd.f32 1.0, %v516
    %v518 = vmul.f32 %v509, %v509
    %v519 = vmul.f32 %v518, -0.00019511016
    %v520 = vadd.f32 %v519, 0.008332121
    %v521 = vmul.f32 %v518, %v520
    %v522 = vadd.f32 %v521, -0.16666654
    %v523 = vmul.f32 %v518, %v522
    %v524 = vadd.f32 %v523, 1.0
    %v525 = vmul.f32 %v524, %v509
    %vm526 = vweird.f32 %v73
    %v527 = vand.u32 %v510, 3
    %vm528 = vcmp.lt.s32.totalorder %v527, 2
    %vm529 = vcmp.eq.s32.totalorder %v527, 0
    %v530 = vxor.u32 %v525, 2147483648
    %v531 = vsel %vm529, %v517, %v530
    %vm532 = vcmp.eq.s32.totalorder %v527, 2
    %v533 = vxor.u32 %v517, 2147483648
    %v534 = vsel %vm532, %v533, %v525
    %v535 = vsel %vm528, %v531, %v534
    %v536 = vsel %vm526, nan, %v535
    %v537 = vand.u32 2147483647, %v74
    %vm538 = vcmp.le.f32.partialorder %v537, 0.7853982
    %vm539 = vcmp.lt.s32.totalorder %v74, 0
    %v540 = vand.u32 %v74, 2139095040
    %v541 = vshrl.u32 %v540, 23
    %v542 = vsub.s32 %v541, 127
    %v543 = vand.u32 2147483647, %v74
    %v544 = vand.u32 %v543, 8388607
    %v545 = vor.u32 %v544, 8388608
    %v546 = vsub.s32 0, %v545
    %v547 = vadd.s32 %v542, 1
    %vm548 = vcmp.gt.s32.totalorder %v547, 0
    %v549 = vsel %vm548, %v547, 0
    %v550 = vshrl.u32 %v549, 5
    %v551 = vand.u32 %v549, 31
    %v552 = vsub.s32 32, %v551
    %v553 = vshrl.u32 683565275, %v552
    %v554 = vshll.u32 683565275, %v551
    %v555 = vshrl.u32 2475754826, %v552
    %v556 = vor.u32 %v554, %v555
    %v557 = vshll.u32 2475754826, %v551
    %v558 = vshrl.u32 2131351028, %v552
    %v559 = vor.u32 %v557, %v558
    %v560 = vshll.u32 2131351028, %v551
    %v561 = vshrl.u32 2102212464, %v552
    %v562 = vor.u32 %v560, %v561
    %v563 = vshll.u32 2102212464, %v551
    %v564 = vshrl.u32 920167782, %v552
    %v565 = vor.u32 %v563, %v564
    %v566 = vshll.u32 920167782, %v551
    %v567 = vshrl.u32 1326507024, %v552
    %v568 = vor.u32 %v566, %v567
    %vm569 = vcmp.lt.s32.totalorder %v550, 1
    %vm570 = vcmp.lt.s32.totalorder %v550, 2
    %vm571 = vcmp.lt.s32.totalorder %v550, 3
    %vm572 = vcmp.lt.s32.totalorder %v550, 4
    %v573 = vsel %vm569, %v553, %v556
    %v574 = vsel %vm572, %v562, 2102212464
    %v575 = vsel %vm571, %v559, %v574
    %v576 = vsel %vm570, %v573, %v575
    %v577 = vsel %vm569, %v556, %v559
    %v578 = vsel %vm572, %v565, 920167782
    %v579 = vsel %vm571, %v562, %v578
    %v580 = vsel %vm570, %v577, %v579
    %v581 = vsel %vm569, %v559, %v562
    %v582 = vsel %vm572, %v568, 1326507024
    %v583 = vsel %vm571, %v565, %v582
    %v584 = vsel %vm570, %v581, %v583
    %v585 = vshll.u32 %v545, 8
    %v586 = vand.u32 %v585, 65535
    %v587 = vshrl.u32 %v585, 16
    %v588 = vand.u32 %v584, 65535
    %v589 = vshrl.u32 %v584, 16
    %v590 = vmul.u32 %v586, %v588
    %v591 = vmul.u32 %v586, %v589
    %v592 = vmul.u32 %v587, %v588
    %v593 = vmul.u32 %v587, %v589
    %v594 = vshll.u32 %v591, 16
    %v595 = vshrl.u32 %v591, 16
    %v596 = vshll.u32 %v592, 16
    %v597 = vshrl.u32 %v592, 16
    %vm598 = vc.u32 %v590, %v594
    %v599 = vsel %vm598, 1, 0
    %v600 = vadd.s32 %v590, %v594
    %v601 = vadd.s32 %v593, %v599
    %vm602 = vc.u32 %v600, %v596
    %v603 = vsel %vm602, 1, 0
    %v604 = vadd.s32 %v600, %v596
    %v605 = vadd.s32 %v601, %v603
    %v606 = vadd.s32 %v605, %v595
    %v607 = vadd.s32 %v606, %v597
    %v608 = vand.u32 %v585, 65535
    %v609 = vshrl.u32 %v585, 16
    %v610 = vand.u32 %v580, 65535
    %v611 = vshrl.u32 %v580, 16
    %v612 = vmul.u32 %v608, %v610
    %v613 = vmul.u32 %v608, %v611
    %v614 = vmul.u32 %v609, %v610
    %v615 = vmul.u32 %v609, %v611
    %v616 = vshll.u32 %v613, 16
    %v617 = vshrl.u32 %v613, 16
    %v618 = vshll.u32 %v614, 16
    %v619 = vshrl.u32 %v614, 16
    %vm620 = vc.u32 %v612, %v616
    %v621 = vsel %vm620, 1, 0
    %v622 = vadd.s32 %v612, %v616
    %v623 = vadd.s32 %v615, %v621
    %vm624 = vc.u32 %v622, %v618
    %v625 = vsel %vm624, 1, 0
    %v626 = vadd.s32 %v622, %v618
    %v627 = vadd.s32 %v623, %v625
    %v628 = vadd.s32 %v627, %v617
    %v629 = vadd.s32 %v628, %v619
    %v630 = vmul.u32 %v585, %v576
    %v631 = vadd.s32 %v607, %v626
    %vm632 = vc.u32 %v607, %v626
    %v633 = vadd.s32 %v629, 1
    %v634 = vsel %vm632, %v633, %v629
    %v635 = vadd.s32 %v630, %v634
    %v636 = vadd.s32 %v635, 536870912
    %v637 = vshrl.u32 %v636, 30
    %v638 = vshll.u32 %v637, 30
    %v639 = vsub.s32 %v635, %v638
    %vm640 = vcmp.lt.s32.totalorder %v639, 0
    %v641 = vsub.s32 0, %v639
    %v642 = vsel %vm640, %v641, %v639
    %v643 = vclz %v642
    %v644 = vsub.s32 %v643, 2
    %vm645 = vcmp.gt.s32.totalorder 0, %v644
    %v646 = vsel %vm645, 0, %v644
    %v647 = vsub.s32 32, %v646
    %v648 = vshll.u32 %v639, %v646
    %v649 = vshrl.u32 %v631, %v647
    %v650 = vor.u32 %v648, %v649
    %v651 = vsub.s32 4294967266, %v646
    %v652 = vadd.s32 %v651, 127
    %v653 = vshll.u32 %v652, 23
    %v654 = vor.u32 4788187, %v653
    %v655 = vand.u32 2147483647, %v654
    %v657 = vcvt.s32.f32 %v650
    %v658 = vmul.f32 %v657, %v655
    %v659 = vxor.u32 %v658, 2147483648
    %v660 = vsel %vm539, %v659, %v658
    %v661 = vsub.s32 4, %v637
    %v662 = vsel %vm539, %v661, %v637
    %v663 = vsel %vm538, %v74, %v660
    %v664 = vsel %vm538, 0, %v662
    %v665 = vmul.f32 %v663, %v663
    %v666 = vmul.f32 %v665, -0.001358992
    %v667 = vadd.f32 %v666, 0.041655596
    %v668 = vmul.f32 %v665, %v667
    %v669 = vadd.f32 %v668, -0.4999988
    %v670 = vmul.f32 %v665, %v669
    %v671 = vadd.f32 1.0, %v670
    %v672 = vmul.f32 %v663, %v663
    %v673 = vmul.f32 %v672, -0.00019511016
    %v674 = vadd.f32 %v673, 0.008332121
    %v675 = vmul.f32 %v672, %v674
    %v676 = vadd.f32 %v675, -0.16666654
    %v677 = vmul.f32 %v672, %v676
    %v678 = vadd.f32 %v677, 1.0
    %v679 = vmul.f32 %v678, %v663
    %vm680 = vweird.f32 %v74
    %v681 = vand.u32 %v664, 3
    %vm682 = vcmp.lt.s32.totalorder %v681, 2
    %vm683 = vcmp.eq.s32.totalorder %v681, 0
    %v684 = vxor.u32 %v679, 2147483648
    %v685 = vsel %vm683, %v671, %v684
    %vm686 = vcmp.eq.s32.totalorder %v681, 2
    %v687 = vxor.u32 %v671, 2147483648
    %v688 = vsel %vm686, %v687, %v679
    %v689 = vsel %vm682, %v685, %v688
    %v690 = vsel %vm680, nan, %v689
    %v691 = vand.u32 2147483647, %v71
    %vm692 = vcmp.le.f32.partialorder %v691, 0.7853982
    %vm693 = vcmp.lt.s32.totalorder %v71, 0
    %v694 = vand.u32 %v71, 2139095040
    %v695 = vshrl.u32 %v694, 23
    %v696 = vsub.s32 %v695, 127
    %v697 = vand.u32 2147483647, %v71
    %v698 = vand.u32 %v697, 8388607
    %v699 = vor.u32 %v698, 8388608
    %v700 = vsub.s32 0, %v699
    %v701 = vadd.s32 %v696, 1
    %vm702 = vcmp.gt.s32.totalorder %v701, 0
    %v703 = vsel %vm702, %v701, 0
    %v704 = vshrl.u32 %v703, 5
    %v705 = vand.u32 %v703, 31
    %v706 = vsub.s32 32, %v705
    %v707 = vshrl.u32 683565275, %v706
    %v708 = vshll.u32 683565275, %v705
    %v709 = vshrl.u32 2475754826, %v706
    %v710 = vor.u32 %v708, %v709
    %v711 = vshll.u32 2475754826, %v705
    %v712 = vshrl.u32 2131351028, %v706
    %v713 = vor.u32 %v711, %v712
    %v714 = vshll.u32 2131351028, %v705
    %v715 = vshrl.u32 2102212464, %v706
    %v716 = vor.u32 %v714, %v715
    %v717 = vshll.u32 2102212464, %v705
    %v718 = vshrl.u32 920167782, %v706
    %v719 = vor.u32 %v717, %v718
    %v720 = vshll.u32 920167782, %v705
    %v721 = vshrl.u32 1326507024, %v706
    %v722 = vor.u32 %v720, %v721
    %vm723 = vcmp.lt.s32.totalorder %v704, 1
    %vm724 = vcmp.lt.s32.totalorder %v704, 2
    %vm725 = vcmp.lt.s32.totalorder %v704, 3
    %vm726 = vcmp.lt.s32.totalorder %v704, 4
    %v727 = vsel %vm723, %v707, %v710
    %v728 = vsel %vm726, %v716, 2102212464
    %v729 = vsel %vm725, %v713, %v728
    %v730 = vsel %vm724, %v727, %v729
    %v731 = vsel %vm723, %v710, %v713
    %v732 = vsel %vm726, %v719, 920167782
    %v733 = vsel %vm725, %v716, %v732
    %v734 = vsel %vm724, %v731, %v733
    %v735 = vsel %vm723, %v713, %v716
    %v736 = vsel %vm726, %v722, 1326507024
    %v737 = vsel %vm725, %v719, %v736
    %v738 = vsel %vm724, %v735, %v737
    %v739 = vshll.u32 %v699, 8
    %v740 = vand.u32 %v739, 65535
    %v741 = vshrl.u32 %v739, 16
    %v742 = vand.u32 %v738, 65535
    %v743 = vshrl.u32 %v738, 16
    %v744 = vmul.u32 %v740, %v742
    %v745 = vmul.u32 %v740, %v743
    %v746 = vmul.u32 %v741, %v742
    %v747 = vmul.u32 %v741, %v743
    %v748 = vshll.u32 %v745, 16
    %v749 = vshrl.u32 %v745, 16
    %v750 = vshll.u32 %v746, 16
    %v751 = vshrl.u32 %v746, 16
    %vm752 = vc.u32 %v744, %v748
    %v753 = vsel %vm752, 1, 0
    %v754 = vadd.s32 %v744, %v748
    %v755 = vadd.s32 %v747, %v753
    %vm756 = vc.u32 %v754, %v750
    %v757 = vsel %vm756, 1, 0
    %v758 = vadd.s32 %v754, %v750
    %v759 = vadd.s32 %v755, %v757
    %v760 = vadd.s32 %v759, %v749
    %v761 = vadd.s32 %v760, %v751
    %v762 = vand.u32 %v739, 65535
    %v763 = vshrl.u32 %v739, 16
    %v764 = vand.u32 %v734, 65535
    %v765 = vshrl.u32 %v734, 16
    %v766 = vmul.u32 %v762, %v764
    %v767 = vmul.u32 %v762, %v765
    %v768 = vmul.u32 %v763, %v764
    %v769 = vmul.u32 %v763, %v765
    %v770 = vshll.u32 %v767, 16
    %v771 = vshrl.u32 %v767, 16
    %v772 = vshll.u32 %v768, 16
    %v773 = vshrl.u32 %v768, 16
    %vm774 = vc.u32 %v766, %v770
    %v775 = vsel %vm774, 1, 0
    %v776 = vadd.s32 %v766, %v770
    %v777 = vadd.s32 %v769, %v775
    %vm778 = vc.u32 %v776, %v772
    %v779 = vsel %vm778, 1, 0
    %v780 = vadd.s32 %v776, %v772
    %v781 = vadd.s32 %v777, %v779
    %v782 = vadd.s32 %v781, %v771
    %v783 = vadd.s32 %v782, %v773
    %v784 = vmul.u32 %v739, %v730
    %v785 = vadd.s32 %v761, %v780
    %vm786 = vc.u32 %v761, %v780
    %v787 = vadd.s32 %v783, 1
    %v788 = vsel %vm786, %v787, %v783
    %v789 = vadd.s32 %v784, %v788
    %v790 = vadd.s32 %v789, 536870912
    %v791 = vshrl.u32 %v790, 30
    %v792 = vshll.u32 %v791, 30
    %v793 = vsub.s32 %v789, %v792
    %vm794 = vcmp.lt.s32.totalorder %v793, 0
    %v795 = vsub.s32 0, %v793
    %v796 = vsel %vm794, %v795, %v793
    %v797 = vclz %v796
    %v798 = vsub.s32 %v797, 2
    %vm799 = vcmp.gt.s32.totalorder 0, %v798
    %v800 = vsel %vm799, 0, %v798
    %v801 = vsub.s32 32, %v800
    %v802 = vshll.u32 %v793, %v800
    %v803 = vshrl.u32 %v785, %v801
    %v804 = vor.u32 %v802, %v803
    %v805 = vsub.s32 4294967266, %v800
    %v806 = vadd.s32 %v805, 127
    %v807 = vshll.u32 %v806, 23
    %v808 = vor.u32 4788187, %v807
    %v809 = vand.u32 2147483647, %v808
    %v811 = vcvt.s32.f32 %v804
    %v812 = vmul.f32 %v811, %v809
    %v813 = vxor.u32 %v812, 2147483648
    %v814 = vsel %vm693, %v813, %v812
    %v815 = vsub.s32 4, %v791
    %v816 = vsel %vm693, %v815, %v791
    %v817 = vsel %vm692, %v71, %v814
    %v818 = vsel %vm692, 0, %v816
    %v819 = vmul.f32 %v817, %v817
    %v820 = vmul.f32 %v819, -0.001358992
    %v821 = vadd.f32 %v820, 0.041655596
    %v822 = vmul.f32 %v819, %v821
    %v823 = vadd.f32 %v822, -0.4999988
    %v824 = vmul.f32 %v819, %v823
    %v825 = vadd.f32 1.0, %v824
    %v826 = vmul.f32 %v817, %v817
    %v827 = vmul.f32 %v826, -0.00019511016
    %v828 = vadd.f32 %v827, 0.008332121
    %v829 = vmul.f32 %v826, %v828
    %v830 = vadd.f32 %v829, -0.16666654
    %v831 = vmul.f32 %v826, %v830
    %v832 = vadd.f32 %v831, 1.0
    %v833 = vmul.f32 %v832, %v817
    %vm834 = vweird.f32 %v71
    %v835 = vadd.s32 %v818, 3
    %v836 = vand.u32 %v835, 3
    %vm837 = vcmp.lt.s32.totalorder %v836, 2
    %vm838 = vcmp.eq.s32.totalorder %v836, 0
    %v839 = vxor.u32 %v833, 2147483648
    %v840 = vsel %vm838, %v825, %v839
    %vm841 = vcmp.eq.s32.totalorder %v836, 2
    %v842 = vxor.u32 %v825, 2147483648
    %v843 = vsel %vm841, %v842, %v833
    %v844 = vsel %vm837, %v840, %v843
    %v845 = vsel %vm834, nan, %v844
    %v846 = vand.u32 2147483647, %v72
    %vm847 = vcmp.le.f32.partialorder %v846, 0.7853982
    %vm848 = vcmp.lt.s32.totalorder %v72, 0
    %v849 = vand.u32 %v72, 2139095040
    %v850 = vshrl.u32 %v849, 23
    %v851 = vsub.s32 %v850, 127
    %v852 = vand.u32 2147483647, %v72
    %v853 = vand.u32 %v852, 8388607
    %v854 = vor.u32 %v853, 8388608
    %v855 = vsub.s32 0, %v854
    %v856 = vadd.s32 %v851, 1
    %vm857 = vcmp.gt.s32.totalorder %v856, 0
    %v858 = vsel %vm857, %v856, 0
    %v859 = vshrl.u32 %v858, 5
    %v860 = vand.u32 %v858, 31
    %v861 = vsub.s32 32, %v860
    %v862 = vshrl.u32 683565275, %v861
    %v863 = vshll.u32 683565275, %v860
    %v864 = vshrl.u32 2475754826, %v861
    %v865 = vor.u32 %v863, %v864
    %v866 = vshll.u32 2475754826, %v860
    %v867 = vshrl.u32 2131351028, %v861
    %v868 = vor.u32 %v866, %v867
    %v869 = vshll.u32 2131351028, %v860
    %v870 = vshrl.u32 2102212464, %v861
    %v871 = vor.u32 %v869, %v870
    %v872 = vshll.u32 2102212464, %v860
    %v873 = vshrl.u32 920167782, %v861
    %v874 = vor.u32 %v872, %v873
    %v875 = vshll.u32 920167782, %v860
    %v876 = vshrl.u32 1326507024, %v861
    %v877 = vor.u32 %v875, %v876
    %vm878 = vcmp.lt.s32.totalorder %v859, 1
    %vm879 = vcmp.lt.s32.totalorder %v859, 2
    %vm880 = vcmp.lt.s32.totalorder %v859, 3
    %vm881 = vcmp.lt.s32.totalorder %v859, 4
    %v882 = vsel %vm878, %v862, %v865
    %v883 = vsel %vm881, %v871, 2102212464
    %v884 = vsel %vm880, %v868, %v883
    %v885 = vsel %vm879, %v882, %v884
    %v886 = vsel %vm878, %v865, %v868
    %v887 = vsel %vm881, %v874, 920167782
    %v888 = vsel %vm880, %v871, %v887
    %v889 = vsel %vm879, %v886, %v888
    %v890 = vsel %vm878, %v868, %v871
    %v891 = vsel %vm881, %v877, 1326507024
    %v892 = vsel %vm880, %v874, %v891
    %v893 = vsel %vm879, %v890, %v892
    %v894 = vshll.u32 %v854, 8
    %v895 = vand.u32 %v894, 65535
    %v896 = vshrl.u32 %v894, 16
    %v897 = vand.u32 %v893, 65535
    %v898 = vshrl.u32 %v893, 16
    %v899 = vmul.u32 %v895, %v897
    %v900 = vmul.u32 %v895, %v898
    %v901 = vmul.u32 %v896, %v897
    %v902 = vmul.u32 %v896, %v898
    %v903 = vshll.u32 %v900, 16
    %v904 = vshrl.u32 %v900, 16
    %v905 = vshll.u32 %v901, 16
    %v906 = vshrl.u32 %v901, 16
    %vm907 = vc.u32 %v899, %v903
    %v908 = vsel %vm907, 1, 0
    %v909 = vadd.s32 %v899, %v903
    %v910 = vadd.s32 %v902, %v908
    %vm911 = vc.u32 %v909, %v905
    %v912 = vsel %vm911, 1, 0
    %v913 = vadd.s32 %v909, %v905
    %v914 = vadd.s32 %v910, %v912
    %v915 = vadd.s32 %v914, %v904
    %v916 = vadd.s32 %v915, %v906
    %v917 = vand.u32 %v894, 65535
    %v918 = vshrl.u32 %v894, 16
    %v919 = vand.u32 %v889, 65535
    %v920 = vshrl.u32 %v889, 16
    %v921 = vmul.u32 %v917, %v919
    %v922 = vmul.u32 %v917, %v920
    %v923 = vmul.u32 %v918, %v919
    %v924 = vmul.u32 %v918, %v920
    %v925 = vshll.u32 %v922, 16
    %v926 = vshrl.u32 %v922, 16
    %v927 = vshll.u32 %v923, 16
    %v928 = vshrl.u32 %v923, 16
    %vm929 = vc.u32 %v921, %v925
    %v930 = vsel %vm929, 1, 0
    %v931 = vadd.s32 %v921, %v925
    %v932 = vadd.s32 %v924, %v930
    %vm933 = vc.u32 %v931, %v927
    %v934 = vsel %vm933, 1, 0
    %v935 = vadd.s32 %v931, %v927
    %v936 = vadd.s32 %v932, %v934
    %v937 = vadd.s32 %v936, %v926
    %v938 = vadd.s32 %v937, %v928
    %v939 = vmul.u32 %v894, %v885
    %v940 = vadd.s32 %v916, %v935
    %vm941 = vc.u32 %v916, %v935
    %v942 = vadd.s32 %v938, 1
    %v943 = vsel %vm941, %v942, %v938
    %v944 = vadd.s32 %v939, %v943
    %v945 = vadd.s32 %v944, 536870912
    %v946 = vshrl.u32 %v945, 30
    %v947 = vshll.u32 %v946, 30
    %v948 = vsub.s32 %v944, %v947
    %vm949 = vcmp.lt.s32.totalorder %v948, 0
    %v950 = vsub.s32 0, %v948
    %v951 = vsel %vm949, %v950, %v948
    %v952 = vclz %v951
    %v953 = vsub.s32 %v952, 2
    %vm954 = vcmp.gt.s32.totalorder 0, %v953
    %v955 = vsel %vm954, 0, %v953
    %v956 = vsub.s32 32, %v955
    %v957 = vshll.u32 %v948, %v955
    %v958 = vshrl.u32 %v940, %v956
    %v959 = vor.u32 %v957, %v958
    %v960 = vsub.s32 4294967266, %v955
    %v961 = vadd.s32 %v960, 127
    %v962 = vshll.u32 %v961, 23
    %v963 = vor.u32 4788187, %v962
    %v964 = vand.u32 2147483647, %v963
    %v966 = vcvt.s32.f32 %v959
    %v967 = vmul.f32 %v966, %v964
    %v968 = vxor.u32 %v967, 2147483648
    %v969 = vsel %vm848, %v968, %v967
    %v970 = vsub.s32 4, %v946
    %v971 = vsel %vm848, %v970, %v946
    %v972 = vsel %vm847, %v72, %v969
    %v973 = vsel %vm847, 0, %v971
    %v974 = vmul.f32 %v972, %v972
    %v975 = vmul.f32 %v974, -0.001358992
    %v976 = vadd.f32 %v975, 0.041655596
    %v977 = vmul.f32 %v974, %v976
    %v978 = vadd.f32 %v977, -0.4999988
    %v979 = vmul.f32 %v974, %v978
    %v980 = vadd.f32 1.0, %v979
    %v981 = vmul.f32 %v972, %v972
    %v982 = vmul.f32 %v981, -0.00019511016
    %v983 = vadd.f32 %v982, 0.008332121
    %v984 = vmul.f32 %v981, %v983
    %v985 = vadd.f32 %v984, -0.16666654
    %v986 = vmul.f32 %v981, %v985
    %v987 = vadd.f32 %v986, 1.0
    %v988 = vmul.f32 %v987, %v972
    %vm989 = vweird.f32 %v72
    %v990 = vadd.s32 %v973, 3
    %v991 = vand.u32 %v990, 3
    %vm992 = vcmp.lt.s32.totalorder %v991, 2
    %vm993 = vcmp.eq.s32.totalorder %v991, 0
    %v994 = vxor.u32 %v988, 2147483648
    %v995 = vsel %vm993, %v980, %v994
    %vm996 = vcmp.eq.s32.totalorder %v991, 2
    %v997 = vxor.u32 %v980, 2147483648
    %v998 = vsel %vm996, %v997, %v988
    %v999 = vsel %vm992, %v995, %v998
    %v1000 = vsel %vm989, nan, %v999
    %v1001 = vand.u32 2147483647, %v73
    %vm1002 = vcmp.le.f32.partialorder %v1001, 0.7853982
    %vm1003 = vcmp.lt.s32.totalorder %v73, 0
    %v1004 = vand.u32 %v73, 2139095040
    %v1005 = vshrl.u32 %v1004, 23
    %v1006 = vsub.s32 %v1005, 127
    %v1007 = vand.u32 2147483647, %v73
    %v1008 = vand.u32 %v1007, 8388607
    %v1009 = vor.u32 %v1008, 8388608
    %v1010 = vsub.s32 0, %v1009
    %v1011 = vadd.s32 %v1006, 1
    %vm1012 = vcmp.gt.s32.totalorder %v1011, 0
    %v1013 = vsel %vm1012, %v1011, 0
    %v1014 = vshrl.u32 %v1013, 5
    %v1015 = vand.u32 %v1013, 31
    %v1016 = vsub.s32 32, %v1015
    %v1017 = vshrl.u32 683565275, %v1016
    %v1018 = vshll.u32 683565275, %v1015
    %v1019 = vshrl.u32 2475754826, %v1016
    %v1020 = vor.u32 %v1018, %v1019
    %v1021 = vshll.u32 2475754826, %v1015
    %v1022 = vshrl.u32 2131351028, %v1016
    %v1023 = vor.u32 %v1021, %v1022
    %v1024 = vshll.u32 2131351028, %v1015
    %v1025 = vshrl.u32 2102212464, %v1016
    %v1026 = vor.u32 %v1024, %v1025
    %v1027 = vshll.u32 2102212464, %v1015
    %v1028 = vshrl.u32 920167782, %v1016
    %v1029 = vor.u32 %v1027, %v1028
    %v1030 = vshll.u32 920167782, %v1015
    %v1031 = vshrl.u32 1326507024, %v1016
    %v1032 = vor.u32 %v1030, %v1031
    %vm1033 = vcmp.lt.s32.totalorder %v1014, 1
    %vm1034 = vcmp.lt.s32.totalorder %v1014, 2
    %vm1035 = vcmp.lt.s32.totalorder %v1014, 3
    %vm1036 = vcmp.lt.s32.totalorder %v1014, 4
    %v1037 = vsel %vm1033, %v1017, %v1020
    %v1038 = vsel %vm1036, %v1026, 2102212464
    %v1039 = vsel %vm1035, %v1023, %v1038
    %v1040 = vsel %vm1034, %v1037, %v1039
    %v1041 = vsel %vm1033, %v1020, %v1023
    %v1042 = vsel %vm1036, %v1029, 920167782
    %v1043 = vsel %vm1035, %v1026, %v1042
    %v1044 = vsel %vm1034, %v1041, %v1043
    %v1045 = vsel %vm1033, %v1023, %v1026
    %v1046 = vsel %vm1036, %v1032, 1326507024
    %v1047 = vsel %vm1035, %v1029, %v1046
    %v1048 = vsel %vm1034, %v1045, %v1047
    %v1049 = vshll.u32 %v1009, 8
    %v1050 = vand.u32 %v1049, 65535
    %v1051 = vshrl.u32 %v1049, 16
    %v1052 = vand.u32 %v1048, 65535
    %v1053 = vshrl.u32 %v1048, 16
    %v1054 = vmul.u32 %v1050, %v1052
    %v1055 = vmul.u32 %v1050, %v1053
    %v1056 = vmul.u32 %v1051, %v1052
    %v1057 = vmul.u32 %v1051, %v1053
    %v1058 = vshll.u32 %v1055, 16
    %v1059 = vshrl.u32 %v1055, 16
    %v1060 = vshll.u32 %v1056, 16
    %v1061 = vshrl.u32 %v1056, 16
    %vm1062 = vc.u32 %v1054, %v1058
    %v1063 = vsel %vm1062, 1, 0
    %v1064 = vadd.s32 %v1054, %v1058
    %v1065 = vadd.s32 %v1057, %v1063
    %vm1066 = vc.u32 %v1064, %v1060
    %v1067 = vsel %vm1066, 1, 0
    %v1068 = vadd.s32 %v1064, %v1060
    %v1069 = vadd.s32 %v1065, %v1067
    %v1070 = vadd.s32 %v1069, %v1059
    %v1071 = vadd.s32 %v1070, %v1061
    %v1072 = vand.u32 %v1049, 65535
    %v1073 = vshrl.u32 %v1049, 16
    %v1074 = vand.u32 %v1044, 65535
    %v1075 = vshrl.u32 %v1044, 16
    %v1076 = vmul.u32 %v1072, %v1074
    %v1077 = vmul.u32 %v1072, %v1075
    %v1078 = vmul.u32 %v1073, %v1074
    %v1079 = vmul.u32 %v1073, %v1075
    %v1080 = vshll.u32 %v1077, 16
    %v1081 = vshrl.u32 %v1077, 16
    %v1082 = vshll.u32 %v1078, 16
    %v1083 = vshrl.u32 %v1078, 16
    %vm1084 = vc.u32 %v1076, %v1080
    %v1085 = vsel %vm1084, 1, 0
    %v1086 = vadd.s32 %v1076, %v1080
    %v1087 = vadd.s32 %v1079, %v1085
    %vm1088 = vc.u32 %v1086, %v1082
    %v1089 = vsel %vm1088, 1, 0
    %v1090 = vadd.s32 %v1086, %v1082
    %v1091 = vadd.s32 %v1087, %v1089
    %v1092 = vadd.s32 %v1091, %v1081
    %v1093 = vadd.s32 %v1092, %v1083
    %v1094 = vmul.u32 %v1049, %v1040
    %v1095 = vadd.s32 %v1071, %v1090
    %vm1096 = vc.u32 %v1071, %v1090
    %v1097 = vadd.s32 %v1093, 1
    %v1098 = vsel %vm1096, %v1097, %v1093
    %v1099 = vadd.s32 %v1094, %v1098
    %v1100 = vadd.s32 %v1099, 536870912
    %v1101 = vshrl.u32 %v1100, 30
    %v1102 = vshll.u32 %v1101, 30
    %v1103 = vsub.s32 %v1099, %v1102
    %vm1104 = vcmp.lt.s32.totalorder %v1103, 0
    %v1105 = vsub.s32 0, %v1103
    %v1106 = vsel %vm1104, %v1105, %v1103
    %v1107 = vclz %v1106
    %v1108 = vsub.s32 %v1107, 2
    %vm1109 = vcmp.gt.s32.totalorder 0, %v1108
    %v1110 = vsel %vm1109, 0, %v1108
    %v1111 = vsub.s32 32, %v1110
    %v1112 = vshll.u32 %v1103, %v1110
    %v1113 = vshrl.u32 %v1095, %v1111
    %v1114 = vor.u32 %v1112, %v1113
    %v1115 = vsub.s32 4294967266, %v1110
    %v1116 = vadd.s32 %v1115, 127
    %v1117 = vshll.u32 %v1116, 23
    %v1118 = vor.u32 4788187, %v1117
    %v1119 = vand.u32 2147483647, %v1118
    %v1121 = vcvt.s32.f32 %v1114
    %v1122 = vmul.f32 %v1121, %v1119
    %v1123 = vxor.u32 %v1122, 2147483648
    %v1124 = vsel %vm1003, %v1123, %v1122
    %v1125 = vsub.s32 4, %v1101
    %v1126 = vsel %vm1003, %v1125, %v1101
    %v1127 = vsel %vm1002, %v73, %v1124
    %v1128 = vsel %vm1002, 0, %v1126
    %v1129 = vmul.f32 %v1127, %v1127
    %v1130 = vmul.f32 %v1129, -0.001358992
    %v1131 = vadd.f32 %v1130, 0.041655596
    %v1132 = vmul.f32 %v1129, %v1131
    %v1133 = vadd.f32 %v1132, -0.4999988
    %v1134 = vmul.f32 %v1129, %v1133
    %v1135 = vadd.f32 1.0, %v1134
    %v1136 = vmul.f32 %v1127, %v1127
    %v1137 = vmul.f32 %v1136, -0.00019511016
    %v1138 = vadd.f32 %v1137, 0.008332121
    %v1139 = vmul.f32 %v1136, %v1138
    %v1140 = vadd.f32 %v1139, -0.16666654
    %v1141 = vmul.f32 %v1136, %v1140
    %v1142 = vadd.f32 %v1141, 1.0
    %v1143 = vmul.f32 %v1142, %v1127
    %vm1144 = vweird.f32 %v73
    %v1145 = vadd.s32 %v1128, 3
    %v1146 = vand.u32 %v1145, 3
    %vm1147 = vcmp.lt.s32.totalorder %v1146, 2
    %vm1148 = vcmp.eq.s32.totalorder %v1146, 0
    %v1149 = vxor.u32 %v1143, 2147483648
    %v1150 = vsel %vm1148, %v1135, %v1149
    %vm1151 = vcmp.eq.s32.totalorder %v1146, 2
    %v1152 = vxor.u32 %v1135, 2147483648
    %v1153 = vsel %vm1151, %v1152, %v1143
    %v1154 = vsel %vm1147, %v1150, %v1153
    %v1155 = vsel %vm1144, nan, %v1154
    %v1156 = vand.u32 2147483647, %v74
    %vm1157 = vcmp.le.f32.partialorder %v1156, 0.7853982
    %vm1158 = vcmp.lt.s32.totalorder %v74, 0
    %v1159 = vand.u32 %v74, 2139095040
    %v1160 = vshrl.u32 %v1159, 23
    %v1161 = vsub.s32 %v1160, 127
    %v1162 = vand.u32 2147483647, %v74
    %v1163 = vand.u32 %v1162, 8388607
    %v1164 = vor.u32 %v1163, 8388608
    %v1165 = vsub.s32 0, %v1164
    %v1166 = vadd.s32 %v1161, 1
    %vm1167 = vcmp.gt.s32.totalorder %v1166, 0
    %v1168 = vsel %vm1167, %v1166, 0
    %v1169 = vshrl.u32 %v1168, 5
    %v1170 = vand.u32 %v1168, 31
    %v1171 = vsub.s32 32, %v1170
    %v1172 = vshrl.u32 683565275, %v1171
    %v1173 = vshll.u32 683565275, %v1170
    %v1174 = vshrl.u32 2475754826, %v1171
    %v1175 = vor.u32 %v1173, %v1174
    %v1176 = vshll.u32 2475754826, %v1170
    %v1177 = vshrl.u32 2131351028, %v1171
    %v1178 = vor.u32 %v1176, %v1177
    %v1179 = vshll.u32 2131351028, %v1170
    %v1180 = vshrl.u32 2102212464, %v1171
    %v1181 = vor.u32 %v1179, %v1180
    %v1182 = vshll.u32 2102212464, %v1170
    %v1183 = vshrl.u32 920167782, %v1171
    %v1184 = vor.u32 %v1182, %v1183
    %v1185 = vshll.u32 920167782, %v1170
    %v1186 = vshrl.u32 1326507024, %v1171
    %v1187 = vor.u32 %v1185, %v1186
    %vm1188 = vcmp.lt.s32.totalorder %v1169, 1
    %vm1189 = vcmp.lt.s32.totalorder %v1169, 2
    %vm1190 = vcmp.lt.s32.totalorder %v1169, 3
    %vm1191 = vcmp.lt.s32.totalorder %v1169, 4
    %v1192 = vsel %vm1188, %v1172, %v1175
    %v1193 = vsel %vm1191, %v1181, 2102212464
    %v1194 = vsel %vm1190, %v1178, %v1193
    %v1195 = vsel %vm1189, %v1192, %v1194
    %v1196 = vsel %vm1188, %v1175, %v1178
    %v1197 = vsel %vm1191, %v1184, 920167782
    %v1198 = vsel %vm1190, %v1181, %v1197
    %v1199 = vsel %vm1189, %v1196, %v1198
    %v1200 = vsel %vm1188, %v1178, %v1181
    %v1201 = vsel %vm1191, %v1187, 1326507024
    %v1202 = vsel %vm1190, %v1184, %v1201
    %v1203 = vsel %vm1189, %v1200, %v1202
    %v1204 = vshll.u32 %v1164, 8
    %v1205 = vand.u32 %v1204, 65535
    %v1206 = vshrl.u32 %v1204, 16
    %v1207 = vand.u32 %v1203, 65535
    %v1208 = vshrl.u32 %v1203, 16
    %v1209 = vmul.u32 %v1205, %v1207
    %v1210 = vmul.u32 %v1205, %v1208
    %v1211 = vmul.u32 %v1206, %v1207
    %v1212 = vmul.u32 %v1206, %v1208
    %v1213 = vshll.u32 %v1210, 16
    %v1214 = vshrl.u32 %v1210, 16
    %v1215 = vshll.u32 %v1211, 16
    %v1216 = vshrl.u32 %v1211, 16
    %vm1217 = vc.u32 %v1209, %v1213
    %v1218 = vsel %vm1217, 1, 0
    %v1219 = vadd.s32 %v1209, %v1213
    %v1220 = vadd.s32 %v1212, %v1218
    %vm1221 = vc.u32 %v1219, %v1215
    %v1222 = vsel %vm1221, 1, 0
    %v1223 = vadd.s32 %v1219, %v1215
    %v1224 = vadd.s32 %v1220, %v1222
    %v1225 = vadd.s32 %v1224, %v1214
    %v1226 = vadd.s32 %v1225, %v1216
    %v1227 = vand.u32 %v1204, 65535
    %v1228 = vshrl.u32 %v1204, 16
    %v1229 = vand.u32 %v1199, 65535
    %v1230 = vshrl.u32 %v1199, 16
    %v1231 = vmul.u32 %v1227, %v1229
    %v1232 = vmul.u32 %v1227, %v1230
    %v1233 = vmul.u32 %v1228, %v1229
    %v1234 = vmul.u32 %v1228, %v1230
    %v1235 = vshll.u32 %v1232, 16
    %v1236 = vshrl.u32 %v1232, 16
    %v1237 = vshll.u32 %v1233, 16
    %v1238 = vshrl.u32 %v1233, 16
    %vm1239 = vc.u32 %v1231, %v1235
    %v1240 = vsel %vm1239, 1, 0
    %v1241 = vadd.s32 %v1231, %v1235
    %v1242 = vadd.s32 %v1234, %v1240
    %vm1243 = vc.u32 %v1241, %v1237
    %v1244 = vsel %vm1243, 1, 0
    %v1245 = vadd.s32 %v1241, %v1237
    %v1246 = vadd.s32 %v1242, %v1244
    %v1247 = vadd.s32 %v1246, %v1236
    %v1248 = vadd.s32 %v1247, %v1238
    %v1249 = vmul.u32 %v1204, %v1195
    %v1250 = vadd.s32 %v1226, %v1245
    %vm1251 = vc.u32 %v1226, %v1245
    %v1252 = vadd.s32 %v1248, 1
    %v1253 = vsel %vm1251, %v1252, %v1248
    %v1254 = vadd.s32 %v1249, %v1253
    %v1255 = vadd.s32 %v1254, 536870912
    %v1256 = vshrl.u32 %v1255, 30
    %v1257 = vshll.u32 %v1256, 30
    %v1258 = vsub.s32 %v1254, %v1257
    %vm1259 = vcmp.lt.s32.totalorder %v1258, 0
    %v1260 = vsub.s32 0, %v1258
    %v1261 = vsel %vm1259, %v1260, %v1258
    %v1262 = vclz %v1261
    %v1263 = vsub.s32 %v1262, 2
    %vm1264 = vcmp.gt.s32.totalorder 0, %v1263
    %v1265 = vsel %vm1264, 0, %v1263
    %v1266 = vsub.s32 32, %v1265
    %v1267 = vshll.u32 %v1258, %v1265
    %v1268 = vshrl.u32 %v1250, %v1266
    %v1269 = vor.u32 %v1267, %v1268
    %v1270 = vsub.s32 4294967266, %v1265
    %v1271 = vadd.s32 %v1270, 127
    %v1272 = vshll.u32 %v1271, 23
    %v1273 = vor.u32 4788187, %v1272
    %v1274 = vand.u32 2147483647, %v1273
    %v1276 = vcvt.s32.f32 %v1269
    %v1277 = vmul.f32 %v1276, %v1274
    %v1278 = vxor.u32 %v1277, 2147483648
    %v1279 = vsel %vm1158, %v1278, %v1277
    %v1280 = vsub.s32 4, %v1256
    %v1281 = vsel %vm1158, %v1280, %v1256
    %v1282 = vsel %vm1157, %v74, %v1279
    %v1283 = vsel %vm1157, 0, %v1281
    %v1284 = vmul.f32 %v1282, %v1282
    %v1285 = vmul.f32 %v1284, -0.001358992
    %v1286 = vadd.f32 %v1285, 0.041655596
    %v1287 = vmul.f32 %v1284, %v1286
    %v1288 = vadd.f32 %v1287, -0.4999988
    %v1289 = vmul.f32 %v1284, %v1288
    %v1290 = vadd.f32 1.0, %v1289
    %v1291 = vmul.f32 %v1282, %v1282
    %v1292 = vmul.f32 %v1291, -0.00019511016
    %v1293 = vadd.f32 %v1292, 0.008332121
    %v1294 = vmul.f32 %v1291, %v1293
    %v1295 = vadd.f32 %v1294, -0.16666654
    %v1296 = vmul.f32 %v1291, %v1295
    %v1297 = vadd.f32 %v1296, 1.0
    %v1298 = vmul.f32 %v1297, %v1282
    %vm1299 = vweird.f32 %v74
    %v1300 = vadd.s32 %v1283, 3
    %v1301 = vand.u32 %v1300, 3
    %vm1302 = vcmp.lt.s32.totalorder %v1301, 2
    %vm1303 = vcmp.eq.s32.totalorder %v1301, 0
    %v1304 = vxor.u32 %v1298, 2147483648
    %v1305 = vsel %vm1303, %v1290, %v1304
    %vm1306 = vcmp.eq.s32.totalorder %v1301, 2
    %v1307 = vxor.u32 %v1290, 2147483648
    %v1308 = vsel %vm1306, %v1307, %v1298
    %v1309 = vsel %vm1302, %v1305, %v1308
    %v1310 = vsel %vm1299, nan, %v1309
    %v1311 = vlaneseq
    %v1312 = vand.u32 %v1311, 127
    %vm1313 = vcmp.lt.s32.totalorder %v1312, 0
    %v1314 = vsub.s32 0, %v1312
    %v1315 = vsel %vm1313, %v1314, %v1312
    %v1316 = vshrl.u32 %v1315, 5
    %v1317 = vand.u32 %v1315, 31
    %v1318 = vsub.s32 0, %v1317
    %v1319 = vsel %vm1313, %v1318, %v1317
    %vm1320 = vcmp.ne.s32.totalorder %v1319, 0
    %vm1321 = vcmp.lt.s32.totalorder %v1319, 0
    %vm1322 = vmand %vm1321, %vm1320
    %v1323 = vadd.s32 %v1319, 32
    %v1324 = vsel %vm1322, %v1323, %v1319
    %vm1325 = vcmp.lt.s32.totalorder %v1324, 16
    %1326 = vrot.lane.b32.xlu0 %v15, 112
    %v1327 = vpop.permute.xlu0 %1326
    %1328 = vrot.lane.b32.xlu0 %v16, 112
    %v1329 = vpop.permute.xlu0 %1328
    %1330 = vrot.lane.b32.xlu0 %v17, 112
    %v1331 = vpop.permute.xlu0 %1330
    %1332 = vrot.lane.b32.xlu0 %v18, 112
    %v1333 = vpop.permute.xlu0 %1332
    %1334 = vrot.lane.b32.xlu0 %v15, 16
    %v1335 = vpop.permute.xlu0 %1334
    %1336 = vrot.lane.b32.xlu0 %v16, 16
    %v1337 = vpop.permute.xlu0 %1336
    %1338 = vrot.lane.b32.xlu0 %v17, 16
    %v1339 = vpop.permute.xlu0 %1338
    %1340 = vrot.lane.b32.xlu0 %v18, 16
    %v1341 = vpop.permute.xlu0 %1340
    %v1342 = vsel %vm1325, %v1327, %v1335
    %v1343 = vsel %vm1325, %v1329, %v1337
    %v1344 = vsel %vm1325, %v1331, %v1339
    %v1345 = vsel %vm1325, %v1333, %v1341
    %v1346 = vmul.f32 %v15, %v228
    %v1347 = vmul.f32 %v16, %v382
    %v1348 = vmul.f32 %v17, %v536
    %v1349 = vmul.f32 %v18, %v690
    %v1350 = vmul.f32 %v1342, %v845
    %v1351 = vmul.f32 %v1343, %v1000
    %v1352 = vmul.f32 %v1344, %v1155
    %v1353 = vmul.f32 %v1345, %v1310
    %v1354 = vadd.f32 %v1346, %v1350
    %v1355 = vadd.f32 %v1347, %v1351
    %v1356 = vadd.f32 %v1348, %v1352
    %v1357 = vadd.f32 %v1349, %v1353
    %1358 = vst [vmem:[#allocation2] sm:$0xff] %v1354
    %1359 = vst [vmem:[#allocation2 + $0x8] sm:$0xff] %v1355
    %1360 = vst [vmem:[#allocation2 + $0x10] sm:$0xff] %v1356
    %1361 = vst [vmem:[#allocation2 + $0x18] sm:$0xff] %v1357
    // Predicated region
    $region14: #{tpu_custom_call.1} parent=1 // pred_check
      _
    $region15: #{tpu_custom_call.1} parent=1 // pred_check_branch
      %1363 = sbr.rel (0) target = $region17
    $region16: #{tpu_custom_call.1} parent=1 // pred_region
      %1365 = vsyncadd [#allocation3], 0
      %s1366 = sshll.u32 [#allocation2], 4
      %s1367 = int_to_ptr.vmem [resolvable:$true] %s1366
      %s1368 = sshll.u32 %s3, 4
      %s1369 = int_to_ptr.hbm [resolvable:$true] %s1368
      %1374 = dma.vmem_to_hbm [thread:$0]  %s1367, 512, %s1369, [#allocation3], 128, 128, 8
    $region17: #{tpu_custom_call.1} parent=1 // pred_fallthru
      _
    // Predicated region
    $region18: #{tpu_custom_call.1} parent=1 // pred_check
      _
    $region19: #{tpu_custom_call.1} parent=1 // pred_check_branch
      %1376 = sbr.rel (0) target = $region21
    $region20: #{tpu_custom_call.1} parent=1 // pred_region
      %1378 = dma.done [#allocation3], 512
    $region21: #{tpu_custom_call.1} parent=1 // pred_fallthru
      _
    %1379 = vsyncpa [#allocation3], 1

</llo_original>
